<compile_context>
chip_gen: v5e
topology: v5e:2x2
jax: 0.10.0
libtpu: 0.0.40
codegen_flags: <defaults>
</compile_context>

<pallas_src>
import jax
import jax.numpy as jnp
from jax.experimental import pallas as pl
from jax.experimental.pallas import tpu as pltpu


_LANE = 1024          # lane-dense last dim (multiple of 128)
_MAX_BLOCK_ROWS = 512 # ~2 MiB per f32 buffer -> safe on v7x's 64 MiB VMEM


def _binarize_train_kernel(x_ref, r_ref, o_ref):
    t = jnp.tanh(x_ref[...])                      # EUP transcendental
    prob = (1.0 + t) * 0.5
    # +1 with probability (1 + tanh(x)) / 2, else -1  (== x + eps in the ref)
    o_ref[...] = jnp.where(r_ref[...] <= prob, 1.0, -1.0).astype(o_ref.dtype)


def _binarize_eval_kernel(x_ref, o_ref):
    o_ref[...] = jnp.sign(x_ref[...]).astype(o_ref.dtype)


def _cdiv(a, b):
    return (a + b - 1) // b


def binarizer_forward(x, is_train, key=None):
    """Pallas equivalent of Binarizer.forward(x, is_train).

    x: float array (any layout, e.g. NCHW).
    is_train: Python bool (static).
    key: jax.random key used only in training mode (torch.rand equivalent).
    """
    orig_shape = x.shape
    orig_dtype = x.dtype
    total = x.size

    # Lane-dense slab: (rows, 1024), row axis tiled.
    rows = _cdiv(total, _LANE)
    if rows <= _MAX_BLOCK_ROWS:
        block_rows = rows
        grid_rows = 1
    else:
        block_rows = _MAX_BLOCK_ROWS
        grid_rows = _cdiv(rows, block_rows)
    rows_padded = grid_rows * block_rows
    padded_total = rows_padded * _LANE

    xf = x.reshape(-1).astype(jnp.float32)
    if padded_total != total:
        xf = jnp.pad(xf, (0, padded_total - total))
    x2 = xf.reshape(rows_padded, _LANE)

    cp = pltpu.CompilerParams(dimension_semantics=("parallel",))
    blk = pl.BlockSpec((block_rows, _LANE), lambda i: (i, 0))

    if is_train:
        if key is None:
            key = jax.random.PRNGKey(0)
        rand = jax.random.uniform(key, (rows_padded, _LANE), dtype=jnp.float32)
        out2 = pl.pallas_call(
            _binarize_train_kernel,
            out_shape=jax.ShapeDtypeStruct((rows_padded, _LANE), jnp.float32),
            grid=(grid_rows,),
            in_specs=[blk, blk],
            out_specs=blk,
            compiler_params=cp,
        )(x2, rand)
    else:
        out2 = pl.pallas_call(
            _binarize_eval_kernel,
            out_shape=jax.ShapeDtypeStruct((rows_padded, _LANE), jnp.float32),
            grid=(grid_rows,),
            in_specs=[blk],
            out_specs=blk,
            compiler_params=cp,
        )(x2)

    out = out2.reshape(-1)[:total].reshape(orig_shape)
    return out.astype(orig_dtype)


if __name__ == "__main__":
    key = jax.random.PRNGKey(0)
    k_data, k_rand = jax.random.split(key)

    # Small NCHW input consistent with the module's conv-style usage.
    x = jax.random.normal(k_data, (2, 4, 16, 16), dtype=jnp.float32)

    # Training mode: stochastic binarization to {-1, +1}.
    y_train = binarizer_forward(x, is_train=True, key=k_rand)
    y_train = jax.block_until_ready(y_train)
    assert y_train.shape == x.shape
    assert bool(jnp.all(jnp.abs(jnp.abs(y_train) - 1.0) < 1e-5))

    # Statistical sanity: mean of outputs should track tanh(x) in expectation.
    assert bool(jnp.abs(jnp.mean(y_train) - jnp.mean(jnp.tanh(x))) < 0.2)

    # Eval mode: sign(x).
    y_eval = binarizer_forward(x, is_train=False)
    y_eval = jax.block_until_ready(y_eval)
    assert y_eval.shape == x.shape
    assert bool(jnp.allclose(y_eval, jnp.sign(x)))

    print("KERNEL_OK")
</pallas_src>

<mosaic_0001>
module attributes {stable_mosaic.version = 11 : i64} {
  func.func @_binarize_train_kernel(%arg0: i32, %arg1: memref<2x1024xf32, #tpu.memory_space<vmem>>, %arg2: memref<2x1024xf32, #tpu.memory_space<vmem>>, %arg3: memref<2x1024xf32, #tpu.memory_space<vmem>>) attributes {dimension_semantics = [#tpu.dimension_semantics<parallel>], iteration_bounds = array<i64: 1>, scalar_prefetch = 0 : i64, scratch_operands = 0 : i64, tpu.core_type = #tpu.core_type<tc>, window_params = [{transform_indices = @transform_0, window_bounds = array<i64: 2, 1024>}, {transform_indices = @transform_1, window_bounds = array<i64: 2, 1024>}, {transform_indices = @transform_2, window_bounds = array<i64: 2, 1024>}]} {
    %c0 = arith.constant 0 : index
    %c0_0 = arith.constant 0 : index
    %0 = vector.load %arg1[%c0, %c0_0] : memref<2x1024xf32, #tpu.memory_space<vmem>>, vector<2x1024xf32>
    %1 = math.tanh %0 : vector<2x1024xf32>
    %cst = arith.constant 1.000000e+00 : f32
    %2 = vector.broadcast %cst : f32 to vector<2x1024xf32>
    %3 = arith.addf %2, %1 : vector<2x1024xf32>
    %cst_1 = arith.constant 5.000000e-01 : f32
    %4 = vector.broadcast %cst_1 : f32 to vector<2x1024xf32>
    %5 = arith.mulf %3, %4 : vector<2x1024xf32>
    %c0_2 = arith.constant 0 : index
    %c0_3 = arith.constant 0 : index
    %6 = vector.load %arg2[%c0_2, %c0_3] : memref<2x1024xf32, #tpu.memory_space<vmem>>, vector<2x1024xf32>
    %7 = arith.cmpf ole, %6, %5 : vector<2x1024xf32>
    %cst_4 = arith.constant 1.000000e+00 : f32
    %cst_5 = arith.constant -1.000000e+00 : f32
    %8 = vector.broadcast %cst_4 : f32 to vector<2x1024xf32>
    %9 = vector.broadcast %cst_5 : f32 to vector<2x1024xf32>
    %10 = arith.select %7, %8, %9 : vector<2x1024xi1>, vector<2x1024xf32>
    %c0_6 = arith.constant 0 : index
    %c0_7 = arith.constant 0 : index
    %11 = vector.load %arg3[%c0_6, %c0_7] : memref<2x1024xf32, #tpu.memory_space<vmem>>, vector<2x1024xf32>
    tpu.vector_store %arg3[%c0_6, %c0_7], %10 {strides = array<i32>} : memref<2x1024xf32, #tpu.memory_space<vmem>>, vector<2x1024xf32>,
    return
  }
  func.func @transform_0(%arg0: i32) -> (i32, i32) {
    %c0_i32 = arith.constant 0 : i32
    %c0_i32_0 = arith.constant 0 : i32
    return %arg0, %c0_i32 : i32, i32
  }
  func.func @transform_1(%arg0: i32) -> (i32, i32) {
    %c0_i32 = arith.constant 0 : i32
    %c0_i32_0 = arith.constant 0 : i32
    return %arg0, %c0_i32 : i32, i32
  }
  func.func @transform_2(%arg0: i32) -> (i32, i32) {
    %c0_i32 = arith.constant 0 : i32
    %c0_i32_0 = arith.constant 0 : i32
    return %arg0, %c0_i32 : i32, i32
  }
}

</mosaic_0001>

<llo_original>
// kernel: tpu_custom_call.1
$region0: #{tpu_custom_call.1}
  #allocation0 [shape = 'u32[]', space=smem, size = 0x4, offset = 0x4, fixed_abs, tag = 'smem constant byte address 0x4 - core index']
  #allocation1 [shape = 'u32[72,128]{1,0:T(1,128)}', space=vmem, size = 0x9000, scoped, tag = 'internal scratch']
  %s0 = inlined_call_operand.hbm [shape: f32[2,1024], index: 0, kind: input, shape index: {}]
  %s1 = inlined_call_operand.hbm [shape: f32[2,1024], index: 1, kind: input, shape index: {}]
  %s2 = inlined_call_operand.hbm [shape: f32[2,1024], index: 2, kind: output, shape index: {}]
  %s3 = sld [smem:[#allocation0]]
  $region26: #{tpu_custom_call.1} parent=0
    _
  %s5 = ssub.s32 1, %s3
  %s6 = scalar_select 0, %s5, %s3
  $region1: #{tpu_custom_call.1} parent=0
    #allocation2 [shape = 'u8[8192]{0}', space=vmem, size = 0x2000, scoped, tag = 'input window, operand 0, single buffered']
    #allocation3 [shape = 's32[1]{0}', space=sflag, size = 0x4, scoped, tag = 'scoped memory for tpu_custom_call.1']
    #allocation4 [shape = 's32[1]{0}', space=sflag, size = 0x4, scoped, tag = 'scoped memory for tpu_custom_call.1']
    #allocation5 [shape = 'u8[8192]{0}', space=vmem, size = 0x2000, scoped, tag = 'input window, operand 1, single buffered']
    #allocation6 [shape = 's32[1]{0}', space=sflag, size = 0x4, scoped, tag = 'scoped memory for tpu_custom_call.1']
    #allocation7 [shape = 'u8[8192]{0}', space=vmem, size = 0x2000, scoped, tag = 'output window, operand 0, single buffered']
    %7 = vsyncpa [#allocation3], 0
    %8 = vsyncpa [#allocation6], 0
    %9 = vsyncpa [#allocation4], 0
    // Predicated region
    $region2: #{tpu_custom_call.1} parent=1 // pred_check
      _
    $region3: #{tpu_custom_call.1} parent=1 // pred_check_branch
      %11 = sbr.rel (0) target = $region5
    $region4: #{tpu_custom_call.1} parent=1 // pred_region
      %13 = vsyncadd [#allocation3], 0
      %s15 = sshll.u32 %s0, 4
      %s16 = int_to_ptr.hbm [resolvable:$true] %s15
      %s17 = sshll.u32 [#allocation2], 4
      %s18 = int_to_ptr.vmem [resolvable:$true] %s17
      %20 = dma.hbm_to_vmem [thread:$0]  %s16, 256, %s18, [#allocation3]
    $region5: #{tpu_custom_call.1} parent=1 // pred_fallthru
      _
    // Predicated region
    $region6: #{tpu_custom_call.1} parent=1 // pred_check
      _
    $region7: #{tpu_custom_call.1} parent=1 // pred_check_branch
      %22 = sbr.rel (0) target = $region9
    $region8: #{tpu_custom_call.1} parent=1 // pred_region
      %24 = vsyncadd [#allocation6], 0
      %s26 = sshll.u32 %s1, 4
      %s27 = int_to_ptr.hbm [resolvable:$true] %s26
      %s28 = sshll.u32 [#allocation5], 4
      %s29 = int_to_ptr.vmem [resolvable:$true] %s28
      %31 = dma.hbm_to_vmem [thread:$0]  %s27, 256, %s29, [#allocation6]
    $region9: #{tpu_custom_call.1} parent=1 // pred_fallthru
      _
    // Predicated region
    $region10: #{tpu_custom_call.1} parent=1 // pred_check
      _
    $region11: #{tpu_custom_call.1} parent=1 // pred_check_branch
      %33 = sbr.rel (0) target = $region13
    $region12: #{tpu_custom_call.1} parent=1 // pred_region
      %35 = dma.done [#allocation3], 256
    $region13: #{tpu_custom_call.1} parent=1 // pred_fallthru
      _
    // Predicated region
    $region14: #{tpu_custom_call.1} parent=1 // pred_check
      _
    $region15: #{tpu_custom_call.1} parent=1 // pred_check_branch
      %37 = sbr.rel (0) target = $region17
    $region16: #{tpu_custom_call.1} parent=1 // pred_region
      %39 = dma.done [#allocation6], 256
    $region17: #{tpu_custom_call.1} parent=1 // pred_fallthru
      _
    %v40 = vld [vmem:[#allocation2] sm:$0xff]
    %v41 = vld [vmem:[#allocation2 + $0x8] sm:$0xff]
    %v42 = vtanh.pop %v40
    %v43 = vtanh.pop %v41
    %v44 = vadd.f32 %v42, 1.0
    %v45 = vadd.f32 %v43, 1.0
    %v46 = vmul.f32 %v44, 0.5
    %v47 = vmul.f32 %v45, 0.5
    %v48 = vld [vmem:[#allocation5] sm:$0xff]
    %v49 = vld [vmem:[#allocation5 + $0x8] sm:$0xff]
    %vm50 = vcmp.le.f32.partialorder %v48, %v46
    %vm51 = vcmp.le.f32.partialorder %v49, %v47
    %v52 = vsel %vm50, 1.0, -1.0
    %v53 = vsel %vm51, 1.0, -1.0
    %54 = vst [vmem:[#allocation7] sm:$0xff] %v52
    %55 = vst [vmem:[#allocation7 + $0x8] sm:$0xff] %v53
    // Predicated region
    $region18: #{tpu_custom_call.1} parent=1 // pred_check
      _
    $region19: #{tpu_custom_call.1} parent=1 // pred_check_branch
      %57 = sbr.rel (0) target = $region21
    $region20: #{tpu_custom_call.1} parent=1 // pred_region
      %59 = vsyncadd [#allocation4], 0
      %s61 = sshll.u32 [#allocation7], 4
      %s62 = int_to_ptr.vmem [resolvable:$true] %s61
      %s63 = sshll.u32 %s2, 4
      %s64 = int_to_ptr.hbm [resolvable:$true] %s63
      %66 = dma.vmem_to_hbm [thread:$0]  %s62, 256, %s64, [#allocation4]
    $region21: #{tpu_custom_call.1} parent=1 // pred_fallthru
      _
    // Predicated region
    $region22: #{tpu_custom_call.1} parent=1 // pred_check
      _
    $region23: #{tpu_custom_call.1} parent=1 // pred_check_branch
      %68 = sbr.rel (0) target = $region25
    $region24: #{tpu_custom_call.1} parent=1 // pred_region
      %70 = dma.done [#allocation4], 256
    $region25: #{tpu_custom_call.1} parent=1 // pred_fallthru
      _
    %71 = vsyncpa [#allocation3], 1
    %72 = vsyncpa [#allocation6], 1
    %73 = vsyncpa [#allocation4], 1

</llo_original>
